<compile_context>
chip_gen: v7x
topology: tpu7x:2x2x1
jax: 0.10.0
libtpu: 0.0.40
codegen_flags: <defaults>
</compile_context>

<pallas_src>
import functools

import jax
import jax.numpy as jnp
from jax import lax
from jax.experimental import pallas as pl
from jax.experimental.pallas import tpu as pltpu


def _cl_tile_kernel(zr_ref, zc_ref, a_ref, b_ref, yc_ref, yr_ref, o_ref, *,
                    tm, tn, b_valid, inv_t, num, margin):
    i = pl.program_id(0)
    j = pl.program_id(1)

    # Output block (tm, tn) is revisited across the j ("arbitrary") axis:
    # initialise once, accumulate per column tile.
    @pl.when(j == 0)
    def _():
        o_ref[...] = jnp.zeros_like(o_ref)

    # Gram on the MXU (bf16 operands pre-cast in the wrapper, f32 accumulation).
    gram = lax.dot_general(
        zr_ref[...], zc_ref[...],
        (((1,), (1,)), ((), ())),
        preferred_element_type=jnp.float32)                    # (tm, tn)

    # d2[i,j] = ||z_i - z_j + eps||^2 via precomputed row terms.
    d2 = jnp.maximum(a_ref[...] + b_ref[...] - 2.0 * gram, 0.0)

    # Positive path: (num * dist / T)^2 = (num/T)^2 * d2   (no sqrt needed).
    pos_scale = (num * inv_t) * (num * inv_t)
    pos_term = d2 * pos_scale
    # Negative path: relu(margin - dist/T)^2.
    far = jnp.maximum(margin - jnp.sqrt(d2) * inv_t, 0.0)
    neg_term = far * far

    same = yc_ref[...] == yr_ref[...]                          # (tm, tn) bool
    contrib = jnp.where(same, pos_term, neg_term)

    # Diagonal / padding masking is only needed on a thin set of tiles; gate it.
    row0 = i * tm
    col0 = j * tn
    touches_diag = jnp.logical_and(row0 < col0 + tn, col0 < row0 + tm)
    touches_pad = jnp.logical_or(row0 + tm > b_valid, col0 + tn > b_valid)
    needs_mask = jnp.logical_or(touches_diag, touches_pad)

    @pl.when(needs_mask)
    def _():
        row_ids = row0 + lax.broadcasted_iota(jnp.int32, (tm, tn), 0)
        col_ids = col0 + lax.broadcasted_iota(jnp.int32, (tm, tn), 1)
        valid = jnp.logical_and(
            row_ids != col_ids,
            jnp.logical_and(row_ids < b_valid, col_ids < b_valid))
        o_ref[...] += jnp.where(valid, contrib, 0.0)

    @pl.when(jnp.logical_not(needs_mask))
    def _():
        o_ref[...] += contrib


def _pick_tile(full, want, align):
    """Largest multiple of `align` dividing `full` that is <= want (else full)."""
    if full <= want:
        return full
    t = (want // align) * align
    while t >= align:
        if full % t == 0:
            return t
        t -= align
    return full


def contrastive_loss(emb_i, emb_j, y, *, temperature=0.5, num=1.0, margin=2.5,
                     block_m=512, block_n=256, mxu_dtype=jnp.bfloat16):
    """Pallas TPU implementation of ContrastiveLoss.forward (single call)."""
    eps_pd, eps_norm = 1e-6, 1e-12

    # Normalize once in the wrapper (memory-bound, fused by XLA) and precompute
    # the per-row terms so the tiled kernel only needs one MXU gram per tile:
    #   d2 = a_i + b_j - 2*z_i.z_j,  a_i = ||z_i||^2 + 2*eps*sum_k z_ik,
    #                                b_j = ||z_j||^2 - 2*eps*sum_k z_jk + D*eps^2
    x = jnp.concatenate([emb_i, emb_j], axis=0).astype(jnp.float32)   # (B, D)
    B, D = x.shape
    assert y.shape == (B,), "y must hold one label per concatenated row"
    nrm = jnp.sqrt(jnp.sum(x * x, axis=1, keepdims=True))
    z = x / jnp.maximum(nrm, eps_norm)                                # (B, D)
    rn = jnp.sum(z * z, axis=1)                                       # (B,)
    s = jnp.sum(z, axis=1)                                            # (B,)
    a_col = (rn + 2.0 * eps_pd * s).reshape(B, 1)
    b_row = (rn - 2.0 * eps_pd * s + D * eps_pd * eps_pd).reshape(1, B)
    y_col = y.astype(jnp.int32).reshape(B, 1)
    y_row = y.astype(jnp.int32).reshape(1, B)

    # Narrow operands once in the wrapper; the kernel only sees bf16 z tiles.
    zb = z.astype(mxu_dtype)

    # Pad B to a multiple of 128 so tiles always exist and are lane-aligned.
    Bp = ((B + 127) // 128) * 128
    pad = Bp - B
    if pad:
        zb = jnp.pad(zb, ((0, pad), (0, 0)))
        a_col = jnp.pad(a_col, ((0, pad), (0, 0)))
        b_row = jnp.pad(b_row, ((0, 0), (0, pad)))
        y_col = jnp.pad(y_col, ((0, pad), (0, 0)), constant_values=-1)
        y_row = jnp.pad(y_row, ((0, 0), (0, pad)), constant_values=-1)

    itemsize = jnp.dtype(mxu_dtype).itemsize

    def vmem_estimate(tm_, tn_):
        # double-buffered z tiles + double-buffered f32 output + small vectors.
        return (2 * (tm_ * D + tn_ * D) * itemsize
                + 2 * tm_ * tn_ * 4
                + 4 * (tm_ + tn_) * 4)

    tm = _pick_tile(Bp, block_m, 16)      # bf16 row tile: 16-row sublane pack
    tn = _pick_tile(Bp, block_n, 128)     # lane-aligned column tile

    # Keep >= 2 row tiles when possible (v7x megacore parallel axis).
    if Bp // tm < 2:
        tm_half = _pick_tile(Bp, max(16, tm // 2), 16)
        if Bp // tm_half >= 2:
            tm = tm_half

    # Keep the working set under a v7x-safe VMEM budget (~36 MiB).
    budget = 36 * 1024 * 1024
    while vmem_estimate(tm, tn) > budget and tm > 16:
        tm = _pick_tile(Bp, max(16, tm // 2), 16)
    while vmem_estimate(tm, tn) > budget and tn > 128:
        tn = _pick_tile(Bp, max(128, tn // 2), 128)

    grid = (Bp // tm, Bp // tn)

    kernel = functools.partial(
        _cl_tile_kernel, tm=tm, tn=tn, b_valid=B,
        inv_t=1.0 / float(temperature), num=float(num), margin=float(margin))

    # Per-row-tile partial sums; the scalar reduce happens in XLA.
    partial = pl.pallas_call(
        kernel,
        out_shape=jax.ShapeDtypeStruct((Bp, tn), jnp.float32),
        grid=grid,
        in_specs=[
            pl.BlockSpec((tm, D), lambda i, j: (i, 0)),   # z row tile (bf16)
            pl.BlockSpec((tn, D), lambda i, j: (j, 0)),   # z column tile (bf16)
            pl.BlockSpec((tm, 1), lambda i, j: (i, 0)),   # a_col (f32)
            pl.BlockSpec((1, tn), lambda i, j: (0, j)),   # b_row (f32)
            pl.BlockSpec((tm, 1), lambda i, j: (i, 0)),   # y_col
            pl.BlockSpec((1, tn), lambda i, j: (0, j)),   # y_row
        ],
        out_specs=pl.BlockSpec((tm, tn), lambda i, j: (i, 0)),
        compiler_params=pltpu.CompilerParams(
            dimension_semantics=("parallel", "arbitrary"),
            vmem_limit_bytes=48 * 1024 * 1024),
    )(zb, zb, a_col, b_row, y_col, y_row)

    return jnp.sum(partial) / (2.0 * B)


def _reference_loss(emb_i, emb_j, y, temperature=0.5, num=1.0, margin=2.5):
    """Pure-JAX reference mirroring the PyTorch forward (single call)."""
    x = jnp.concatenate([emb_i, emb_j], axis=0).astype(jnp.float32)
    B = x.shape[0]
    nrm = jnp.sqrt(jnp.sum(x * x, axis=1, keepdims=True))
    z = x / jnp.maximum(nrm, 1e-12)
    diff = z[:, None, :] - z[None, :, :] + 1e-6
    dist = jnp.sqrt(jnp.sum(diff * diff, axis=-1))
    same = y[:, None] == y[None, :]
    offdiag = ~jnp.eye(B, dtype=bool)
    pos_mask = (same & offdiag).astype(jnp.float32)
    neg_mask = ((~same) & offdiag).astype(jnp.float32)
    scaled = dist / temperature
    pos = num * pos_mask * scaled
    neg = neg_mask * scaled
    sum_p = jnp.sum(pos ** 2, axis=1)
    far = jnp.maximum(margin * neg_mask - neg, 0.0)
    sum_n = jnp.sum(far ** 2, axis=1)
    return jnp.sum(sum_p + sum_n) / (2.0 * B)


if __name__ == "__main__":
    # TODO(synk): the PyTorch module mutates its mask buffers in place (state
    # persists across calls) and computes unused counters/`Near`; only the
    # single-call loss value is reproduced here.
    def run_case(batch_size, dim, n_classes, block_m, block_n, key):
        k1, k2, k3 = jax.random.split(key, 3)
        n = batch_size // 2                    # constructor batch_size == 2 * rows(emb_i)
        emb_i = jax.random.normal(k1, (n, dim), jnp.float32)
        emb_j = jax.random.normal(k2, (n, dim), jnp.float32)
        y = jax.random.randint(k3, (batch_size,), 0, n_classes, dtype=jnp.int32)
        out = jax.block_until_ready(
            contrastive_loss(emb_i, emb_j, y, block_m=block_m, block_n=block_n))
        ref = jax.block_until_ready(_reference_loss(emb_i, emb_j, y))
        assert jnp.allclose(out, ref, rtol=1e-3, atol=1e-3), (out, ref)

    key = jax.random.PRNGKey(0)
    k1, k2, k3 = jax.random.split(key, 3)
    run_case(8, 32, 3, 512, 256, k1)       # tiny shape, padded to 128, masked path
    run_case(256, 128, 4, 128, 128, k2)    # multi-tile grid (2,2): fast + masked paths
    run_case(192, 64, 5, 512, 128, k3)     # awkward B: padding + diagonal gating
    print("KERNEL_OK")
</pallas_src>

<mosaic_0001>
module attributes {stable_mosaic.version = 11 : i64} {
  func.func @_cl_tile_kernel(%arg0: i32, %arg1: i32, %arg2: memref<64x32xbf16, #tpu.memory_space<vmem>>, %arg3: memref<128x32xbf16, #tpu.memory_space<vmem>>, %arg4: memref<64x1xf32, #tpu.memory_space<vmem>>, %arg5: memref<1x128xf32, #tpu.memory_space<vmem>>, %arg6: memref<64x1xi32, #tpu.memory_space<vmem>>, %arg7: memref<1x128xi32, #tpu.memory_space<vmem>>, %arg8: memref<64x128xf32, #tpu.memory_space<vmem>>) attributes {dimension_semantics = [#tpu.dimension_semantics<parallel>, #tpu.dimension_semantics<arbitrary>], iteration_bounds = array<i64: 2, 1>, scalar_prefetch = 0 : i64, scratch_operands = 0 : i64, tpu.core_type = #tpu.core_type<tc>, window_params = [{transform_indices = @transform_0, window_bounds = array<i64: 64, 32>}, {transform_indices = @transform_1, window_bounds = array<i64: 128, 32>}, {transform_indices = @transform_2, window_bounds = array<i64: 64, 1>}, {transform_indices = @transform_3, window_bounds = array<i64: 1, 128>}, {transform_indices = @transform_4, window_bounds = array<i64: 64, 1>}, {transform_indices = @transform_5, window_bounds = array<i64: 1, 128>}, {transform_indices = @transform_6, window_bounds = array<i64: 64, 128>}]} {
    %c0_i32 = arith.constant 0 : i32
    %0 = arith.cmpi eq, %arg1, %c0_i32 : i32
    %1 = arith.extui %0 : i1 to i32
    %c0_i32_0 = arith.constant 0 : i32
    %2 = arith.cmpi ne, %1, %c0_i32_0 : i32
    scf.if %2 {
      %cst_25 = arith.constant 0.000000e+00 : f32
      %50 = vector.broadcast %cst_25 : f32 to vector<64x128xf32>
      %c0_26 = arith.constant 0 : index
      %c0_27 = arith.constant 0 : index
      %51 = vector.load %arg8[%c0_26, %c0_27] : memref<64x128xf32, #tpu.memory_space<vmem>>, vector<64x128xf32>
      tpu.vector_store %arg8[%c0_26, %c0_27], %50 {strides = array<i32>} : memref<64x128xf32, #tpu.memory_space<vmem>>, vector<64x128xf32>,
    } else {
    }
    %c0 = arith.constant 0 : index
    %c0_1 = arith.constant 0 : index
    %3 = vector.load %arg2[%c0, %c0_1] : memref<64x32xbf16, #tpu.memory_space<vmem>>, vector<64x32xbf16>
    %c0_2 = arith.constant 0 : index
    %c0_3 = arith.constant 0 : index
    %4 = vector.load %arg3[%c0_2, %c0_3] : memref<128x32xbf16, #tpu.memory_space<vmem>>, vector<128x32xbf16>
    %cst = arith.constant dense<0.000000e+00> : vector<64x128xf32>
    %5 = tpu.matmul %3, %4, %cst {dimension_numbers = #tpu.dot_dimension_numbers<[1], [1], [0], [0], [0, 0, 1, 0], [], []>} : vector<64x32xbf16>, vector<128x32xbf16>, vector<64x128xf32> -> vector<64x128xf32>
    %c0_4 = arith.constant 0 : index
    %c0_5 = arith.constant 0 : index
    %6 = vector.load %arg4[%c0_4, %c0_5] : memref<64x1xf32, #tpu.memory_space<vmem>>, vector<64x1xf32>
    %c0_6 = arith.constant 0 : index
    %c0_7 = arith.constant 0 : index
    %7 = vector.load %arg5[%c0_6, %c0_7] : memref<1x128xf32, #tpu.memory_space<vmem>>, vector<1x128xf32>
    %8 = vector.broadcast %6 : vector<64x1xf32> to vector<64x128xf32>
    %9 = vector.broadcast %7 : vector<1x128xf32> to vector<64x128xf32>
    %10 = arith.addf %8, %9 : vector<64x128xf32>
    %cst_8 = arith.constant 2.000000e+00 : f32
    %11 = vector.broadcast %cst_8 : f32 to vector<64x128xf32>
    %12 = arith.mulf %11, %5 : vector<64x128xf32>
    %13 = arith.subf %10, %12 : vector<64x128xf32>
    %cst_9 = arith.constant 0.000000e+00 : f32
    %14 = vector.broadcast %cst_9 : f32 to vector<64x128xf32>
    %15 = arith.maximumf %13, %14 : vector<64x128xf32>
    %cst_10 = arith.constant 4.000000e+00 : f32
    %16 = vector.broadcast %cst_10 : f32 to vector<64x128xf32>
    %17 = arith.mulf %15, %16 : vector<64x128xf32>
    %18 = math.sqrt %15 : vector<64x128xf32>
    %cst_11 = arith.constant 2.000000e+00 : f32
    %19 = vector.broadcast %cst_11 : f32 to vector<64x128xf32>
    %20 = arith.mulf %18, %19 : vector<64x128xf32>
    %cst_12 = arith.constant 2.500000e+00 : f32
    %21 = vector.broadcast %cst_12 : f32 to vector<64x128xf32>
    %22 = arith.subf %21, %20 : vector<64x128xf32>
    %cst_13 = arith.constant 0.000000e+00 : f32
    %23 = vector.broadcast %cst_13 : f32 to vector<64x128xf32>
    %24 = arith.maximumf %22, %23 : vector<64x128xf32>
    %25 = arith.mulf %24, %24 : vector<64x128xf32>
    %c0_14 = arith.constant 0 : index
    %c0_15 = arith.constant 0 : index
    %26 = vector.load %arg6[%c0_14, %c0_15] : memref<64x1xi32, #tpu.memory_space<vmem>>, vector<64x1xi32>
    %c0_16 = arith.constant 0 : index
    %c0_17 = arith.constant 0 : index
    %27 = vector.load %arg7[%c0_16, %c0_17] : memref<1x128xi32, #tpu.memory_space<vmem>>, vector<1x128xi32>
    %28 = vector.broadcast %26 : vector<64x1xi32> to vector<64x128xi32>
    %29 = vector.broadcast %27 : vector<1x128xi32> to vector<64x128xi32>
    %30 = arith.cmpi eq, %28, %29 : vector<64x128xi32>
    %31 = arith.select %30, %17, %25 : vector<64x128xi1>, vector<64x128xf32>
    %c64_i32 = arith.constant 64 : i32
    %32 = arith.muli %arg0, %c64_i32 : i32
    %c128_i32 = arith.constant 128 : i32
    %33 = arith.muli %arg1, %c128_i32 : i32
    %c128_i32_18 = arith.constant 128 : i32
    %34 = arith.addi %33, %c128_i32_18 : i32
    %35 = arith.cmpi slt, %32, %34 : i32
    %c64_i32_19 = arith.constant 64 : i32
    %36 = arith.addi %32, %c64_i32_19 : i32
    %37 = arith.cmpi slt, %33, %36 : i32
    %38 = arith.andi %35, %37 : i1
    %c64_i32_20 = arith.constant 64 : i32
    %39 = arith.addi %32, %c64_i32_20 : i32
    %c8_i32 = arith.constant 8 : i32
    %40 = arith.cmpi sgt, %39, %c8_i32 : i32
    %c128_i32_21 = arith.constant 128 : i32
    %41 = arith.addi %33, %c128_i32_21 : i32
    %c8_i32_22 = arith.constant 8 : i32
    %42 = arith.cmpi sgt, %41, %c8_i32_22 : i32
    %43 = arith.ori %40, %42 : i1
    %44 = arith.ori %38, %43 : i1
    %45 = arith.extui %44 : i1 to i32
    %c0_i32_23 = arith.constant 0 : i32
    %46 = arith.cmpi ne, %45, %c0_i32_23 : i32
    scf.if %46 {
      %50 = tpu.iota {dimensions = array<i32: 0>} : vector<64x128xi32>
      %51 = vector.broadcast %32 : i32 to vector<64x128xi32>
      %52 = arith.addi %51, %50 : vector<64x128xi32>
      %53 = tpu.iota {dimensions = array<i32: 1>} : vector<64x128xi32>
      %54 = vector.broadcast %33 : i32 to vector<64x128xi32>
      %55 = arith.addi %54, %53 : vector<64x128xi32>
      %56 = arith.cmpi ne, %52, %55 : vector<64x128xi32>
      %c8_i32_25 = arith.constant 8 : i32
      %57 = vector.broadcast %c8_i32_25 : i32 to vector<64x128xi32>
      %58 = arith.cmpi slt, %52, %57 : vector<64x128xi32>
      %c8_i32_26 = arith.constant 8 : i32
      %59 = vector.broadcast %c8_i32_26 : i32 to vector<64x128xi32>
      %60 = arith.cmpi slt, %55, %59 : vector<64x128xi32>
      %61 = arith.andi %58, %60 : vector<64x128xi1>
      %62 = arith.andi %56, %61 : vector<64x128xi1>
      %c0_27 = arith.constant 0 : index
      %c0_28 = arith.constant 0 : index
      %63 = vector.load %arg8[%c0_27, %c0_28] : memref<64x128xf32, #tpu.memory_space<vmem>>, vector<64x128xf32>
      %cst_29 = arith.constant 0.000000e+00 : f32
      %64 = vector.broadcast %cst_29 : f32 to vector<64x128xf32>
      %65 = arith.select %62, %31, %64 : vector<64x128xi1>, vector<64x128xf32>
      %66 = arith.addf %63, %65 : vector<64x128xf32>
      %c0_30 = arith.constant 0 : index
      %c0_31 = arith.constant 0 : index
      %67 = vector.load %arg8[%c0_30, %c0_31] : memref<64x128xf32, #tpu.memory_space<vmem>>, vector<64x128xf32>
      tpu.vector_store %arg8[%c0_30, %c0_31], %66 {strides = array<i32>} : memref<64x128xf32, #tpu.memory_space<vmem>>, vector<64x128xf32>,
    } else {
    }
    %true = arith.constant true
    %47 = arith.xori %44, %true : i1
    %48 = arith.extui %47 : i1 to i32
    %c0_i32_24 = arith.constant 0 : i32
    %49 = arith.cmpi ne, %48, %c0_i32_24 : i32
    scf.if %49 {
      %c0_25 = arith.constant 0 : index
      %c0_26 = arith.constant 0 : index
      %50 = vector.load %arg8[%c0_25, %c0_26] : memref<64x128xf32, #tpu.memory_space<vmem>>, vector<64x128xf32>
      %51 = arith.addf %50, %31 : vector<64x128xf32>
      %c0_27 = arith.constant 0 : index
      %c0_28 = arith.constant 0 : index
      %52 = vector.load %arg8[%c0_27, %c0_28] : memref<64x128xf32, #tpu.memory_space<vmem>>, vector<64x128xf32>
      tpu.vector_store %arg8[%c0_27, %c0_28], %51 {strides = array<i32>} : memref<64x128xf32, #tpu.memory_space<vmem>>, vector<64x128xf32>,
    } else {
    }
    return
  }
  func.func @transform_0(%arg0: i32, %arg1: i32) -> (i32, i32) {
    %c0_i32 = arith.constant 0 : i32
    %c0_i32_0 = arith.constant 0 : i32
    return %arg0, %c0_i32 : i32, i32
  }
  func.func @transform_1(%arg0: i32, %arg1: i32) -> (i32, i32) {
    %c0_i32 = arith.constant 0 : i32
    %c0_i32_0 = arith.constant 0 : i32
    return %arg1, %c0_i32 : i32, i32
  }
  func.func @transform_2(%arg0: i32, %arg1: i32) -> (i32, i32) {
    %c0_i32 = arith.constant 0 : i32
    %c0_i32_0 = arith.constant 0 : i32
    return %arg0, %c0_i32 : i32, i32
  }
  func.func @transform_3(%arg0: i32, %arg1: i32) -> (i32, i32) {
    %c0_i32 = arith.constant 0 : i32
    %c0_i32_0 = arith.constant 0 : i32
    return %c0_i32, %arg1 : i32, i32
  }
  func.func @transform_4(%arg0: i32, %arg1: i32) -> (i32, i32) {
    %c0_i32 = arith.constant 0 : i32
    %c0_i32_0 = arith.constant 0 : i32
    return %arg0, %c0_i32 : i32, i32
  }
  func.func @transform_5(%arg0: i32, %arg1: i32) -> (i32, i32) {
    %c0_i32 = arith.constant 0 : i32
    %c0_i32_0 = arith.constant 0 : i32
    return %c0_i32, %arg1 : i32, i32
  }
  func.func @transform_6(%arg0: i32, %arg1: i32) -> (i32, i32) {
    %c0_i32 = arith.constant 0 : i32
    %c0_i32_0 = arith.constant 0 : i32
    return %arg0, %c0_i32 : i32, i32
  }
}

</mosaic_0001>

<llo_original>
// kernel: tpu_custom_call.1
$region0: #{tpu_custom_call.1}
  #allocation0 [shape = 'u32[]', space=smem, size = 0x4, offset = 0x4, fixed_abs, tag = 'smem constant byte address 0x4 - core index']
  #allocation1 [shape = 'u32[144,128]{1,0:T(1,128)}', space=vmem, size = 0x12000, scoped, tag = 'internal scratch']
  %s0 = inlined_call_operand.vmem [shape: bf16[128,32], index: 0, kind: input, shape index: {}]
  %s1 = inlined_call_operand.vmem [shape: bf16[128,32], index: 1, kind: input, shape index: {}]
  %s2 = inlined_call_operand.vmem [shape: f32[128,1], index: 2, kind: input, shape index: {}]
  %s3 = inlined_call_operand.vmem [shape: f32[1,128], index: 3, kind: input, shape index: {}]
  %s4 = inlined_call_operand.vmem [shape: s32[128,1], index: 4, kind: input, shape index: {}]
  %s5 = inlined_call_operand.vmem [shape: s32[1,128], index: 5, kind: input, shape index: {}]
  %s6 = inlined_call_operand.hbm [shape: f32[128,128], index: 6, kind: output, shape index: {}]
  %s7 = sld [smem:[#allocation0]]
  $region69: #{tpu_custom_call.1} parent=0
    _
  %s9 = ssub.s32 1, %s7
  %s10 = scalar_select 0, %s9, %s7
  $region1: #{tpu_custom_call.1} parent=0
    #allocation2 [shape = 'u8[65536]{0}', space=vmem, size = 0x10000, scoped, tag = 'output window, operand 0']
    #allocation3 [shape = 's32[2]{0}', space=sflag, size = 0x8, scoped, tag = 'scoped memory for tpu_custom_call.1']
    %11 = vsyncpa [#allocation3], 0
    %s12 = scalar_lea.sflag [#allocation3], 1
    %13 = vsyncpa %s12, 0
    loop: start=0, step=1, limit=4
    $region2: #{tpu_custom_call.1} parent=1 // loop_pre_header
      _
    $region3: #{tpu_custom_call.1} parent=1 // loop_header
      %s15 = sphi 0, %s19
      %p16 = scmp.ge.s32.totalorder %s15, 4
      %s22 = sphi 0, %s34
      %s23 = sphi 0, %s30
      %s24 = sphi 0, %s22
      %s25 = sphi 0, %s23
      %s26 = sphi 0, %s24
      %s27 = sphi 0, %s25
      %s37 = sphi 0, %s39
      %s40 = sphi 0, %s37
      %s41 = sphi 0, %s40
      %s57 = sphi 0, %s41
      %s63 = sphi 0, %s65
      %s66 = sphi 0, %s63
      %s67 = sphi 0, %s66
      %s83 = sphi 0, %s67
      %s89 = sphi 0, %s91
      %s92 = sphi 0, %s89
      %s93 = sphi 0, %s92
      %s109 = sphi 0, %s93
      %s115 = sphi 0, %s117
      %s118 = sphi 0, %s115
      %s119 = sphi 0, %s118
      %s135 = sphi 0, %s119
      %s141 = sphi 0, %s143
      %s144 = sphi 0, %s141
      %s145 = sphi 0, %s144
      %s161 = sphi 0, %s145
      %s167 = sphi 0, %s169
      %s170 = sphi 0, %s167
      %s171 = sphi 0, %s170
      %s187 = sphi 0, %s171
      %s193 = sphi 0, %s195
      %s196 = sphi 0, %s193
      %s197 = sphi 0, %s196
      %s213 = sphi 0, %s197
    $region4: #{tpu_custom_call.1} parent=1 // loop_header_branch
      %18 = sbr.rel (%p16) target = $region8
    $region5: #{tpu_custom_call.1} parent=1 // loop_body
      %s20 = ssub.s32 %s15, 1
      %s21 = ssub.s32 %s15, 2
      %s28 = sadd.s32 1, %s23
      %p29 = scmp.ge.s32.totalorder %s28, 1
      %s30 = scalar_select %p29, 0, %s28
      %s31 = sadd.s32 1, %s22
      %s32 = scalar_select %p29, %s31, %s22
      %p33 = scmp.ge.s32.totalorder %s32, 2
      %s34 = scalar_select %p33, 0, %s32
      %s35 = ssub.s32 %s22, %s34
      %p36 = scmp.eq.s32.totalorder %s35, 0
      %s38 = sadd.s32 %s37, 1
      %s39 = scalar_select %p36, %s37, %s38
      %p42 = pneg %p36
      %p43 = scmp.eq.s32.totalorder %s15, 1
      %p44 = por %p42, %p43
      %p45 = scmp.ne.s32.totalorder %s37, %s40
      %p46 = scmp.eq.s32.totalorder %s15, 0
      %p47 = por %p45, %p46
      %p48 = scmp.ne.s32.totalorder %s37, %s40
      %p49 = scmp.eq.s32.totalorder %s20, 1
      %p50 = por %p48, %p49
      %p51 = scmp.ne.s32.totalorder %s40, %s41
      %p52 = scmp.eq.s32.totalorder %s20, 0
      %p53 = por %p51, %p52
      %p54 = scmp.ne.s32.totalorder %s40, %s41
      %p55 = scmp.eq.s32.totalorder %s21, 1
      %p56 = por %p54, %p55
      %p58 = scmp.ne.s32.totalorder %s41, %s57
      %p59 = scmp.eq.s32.totalorder %s21, 0
      %p60 = por %p58, %p59
      %s61 = ssub.s32 %s23, %s30
      %p62 = scmp.eq.s32.totalorder %s61, 0
      %s64 = sadd.s32 %s63, 1
      %s65 = scalar_select %p62, %s63, %s64
      %p68 = pneg %p62
      %p69 = scmp.eq.s32.totalorder %s15, 1
      %p70 = por %p68, %p69
      %p71 = scmp.ne.s32.totalorder %s63, %s66
      %p72 = scmp.eq.s32.totalorder %s15, 0
      %p73 = por %p71, %p72
      %p74 = scmp.ne.s32.totalorder %s63, %s66
      %p75 = scmp.eq.s32.totalorder %s20, 1
      %p76 = por %p74, %p75
      %p77 = scmp.ne.s32.totalorder %s66, %s67
      %p78 = scmp.eq.s32.totalorder %s20, 0
      %p79 = por %p77, %p78
      %p80 = scmp.ne.s32.totalorder %s66, %s67
      %p81 = scmp.eq.s32.totalorder %s21, 1
      %p82 = por %p80, %p81
      %p84 = scmp.ne.s32.totalorder %s67, %s83
      %p85 = scmp.eq.s32.totalorder %s21, 0
      %p86 = por %p84, %p85
      %s87 = ssub.s32 %s22, %s34
      %p88 = scmp.eq.s32.totalorder %s87, 0
      %s90 = sadd.s32 %s89, 1
      %s91 = scalar_select %p88, %s89, %s90
      %p94 = pneg %p88
      %p95 = scmp.eq.s32.totalorder %s15, 1
      %p96 = por %p94, %p95
      %p97 = scmp.ne.s32.totalorder %s89, %s92
      %p98 = scmp.eq.s32.totalorder %s15, 0
      %p99 = por %p97, %p98
      %p100 = scmp.ne.s32.totalorder %s89, %s92
      %p101 = scmp.eq.s32.totalorder %s20, 1
      %p102 = por %p100, %p101
      %p103 = scmp.ne.s32.totalorder %s92, %s93
      %p104 = scmp.eq.s32.totalorder %s20, 0
      %p105 = por %p103, %p104
      %p106 = scmp.ne.s32.totalorder %s92, %s93
      %p107 = scmp.eq.s32.totalorder %s21, 1
      %p108 = por %p106, %p107
      %p110 = scmp.ne.s32.totalorder %s93, %s109
      %p111 = scmp.eq.s32.totalorder %s21, 0
      %p112 = por %p110, %p111
      %s113 = ssub.s32 %s23, %s30
      %p114 = scmp.eq.s32.totalorder %s113, 0
      %s116 = sadd.s32 %s115, 1
      %s117 = scalar_select %p114, %s115, %s116
      %p120 = pneg %p114
      %p121 = scmp.eq.s32.totalorder %s15, 1
      %p122 = por %p120, %p121
      %p123 = scmp.ne.s32.totalorder %s115, %s118
      %p124 = scmp.eq.s32.totalorder %s15, 0
      %p125 = por %p123, %p124
      %p126 = scmp.ne.s32.totalorder %s115, %s118
      %p127 = scmp.eq.s32.totalorder %s20, 1
      %p128 = por %p126, %p127
      %p129 = scmp.ne.s32.totalorder %s118, %s119
      %p130 = scmp.eq.s32.totalorder %s20, 0
      %p131 = por %p129, %p130
      %p132 = scmp.ne.s32.totalorder %s118, %s119
      %p133 = scmp.eq.s32.totalorder %s21, 1
      %p134 = por %p132, %p133
      %p136 = scmp.ne.s32.totalorder %s119, %s135
      %p137 = scmp.eq.s32.totalorder %s21, 0
      %p138 = por %p136, %p137
      %s139 = ssub.s32 %s22, %s34
      %p140 = scmp.eq.s32.totalorder %s139, 0
      %s142 = sadd.s32 %s141, 1
      %s143 = scalar_select %p140, %s141, %s142
      %p146 = pneg %p140
      %p147 = scmp.eq.s32.totalorder %s15, 1
      %p148 = por %p146, %p147
      %p149 = scmp.ne.s32.totalorder %s141, %s144
      %p150 = scmp.eq.s32.totalorder %s15, 0
      %p151 = por %p149, %p150
      %p152 = scmp.ne.s32.totalorder %s141, %s144
      %p153 = scmp.eq.s32.totalorder %s20, 1
      %p154 = por %p152, %p153
      %p155 = scmp.ne.s32.totalorder %s144, %s145
      %p156 = scmp.eq.s32.totalorder %s20, 0
      %p157 = por %p155, %p156
      %p158 = scmp.ne.s32.totalorder %s144, %s145
      %p159 = scmp.eq.s32.totalorder %s21, 1
      %p160 = por %p158, %p159
      %p162 = scmp.ne.s32.totalorder %s145, %s161
      %p163 = scmp.eq.s32.totalorder %s21, 0
      %p164 = por %p162, %p163
      %s165 = ssub.s32 %s23, %s30
      %p166 = scmp.eq.s32.totalorder %s165, 0
      %s168 = sadd.s32 %s167, 1
      %s169 = scalar_select %p166, %s167, %s168
      %p172 = pneg %p166
      %p173 = scmp.eq.s32.totalorder %s15, 1
      %p174 = por %p172, %p173
      %p175 = scmp.ne.s32.totalorder %s167, %s170
      %p176 = scmp.eq.s32.totalorder %s15, 0
      %p177 = por %p175, %p176
      %p178 = scmp.ne.s32.totalorder %s167, %s170
      %p179 = scmp.eq.s32.totalorder %s20, 1
      %p180 = por %p178, %p179
      %p181 = scmp.ne.s32.totalorder %s170, %s171
      %p182 = scmp.eq.s32.totalorder %s20, 0
      %p183 = por %p181, %p182
      %p184 = scmp.ne.s32.totalorder %s170, %s171
      %p185 = scmp.eq.s32.totalorder %s21, 1
      %p186 = por %p184, %p185
      %p188 = scmp.ne.s32.totalorder %s171, %s187
      %p189 = scmp.eq.s32.totalorder %s21, 0
      %p190 = por %p188, %p189
      %s191 = ssub.s32 %s22, %s34
      %p192 = scmp.eq.s32.totalorder %s191, 0
      %s194 = sadd.s32 %s193, 1
      %s195 = scalar_select %p192, %s193, %s194
      %p198 = pneg %p192
      %p199 = scmp.eq.s32.totalorder %s15, 1
      %p200 = por %p198, %p199
      %p201 = scmp.ne.s32.totalorder %s193, %s196
      %p202 = scmp.eq.s32.totalorder %s15, 0
      %p203 = por %p201, %p202
      %p204 = scmp.ne.s32.totalorder %s193, %s196
      %p205 = scmp.eq.s32.totalorder %s20, 1
      %p206 = por %p204, %p205
      %p207 = scmp.ne.s32.totalorder %s196, %s197
      %p208 = scmp.eq.s32.totalorder %s20, 0
      %p209 = por %p207, %p208
      %p210 = scmp.ne.s32.totalorder %s196, %s197
      %p211 = scmp.eq.s32.totalorder %s21, 1
      %p212 = por %p210, %p211
      %p214 = scmp.ne.s32.totalorder %s197, %s213
      %p215 = scmp.eq.s32.totalorder %s21, 0
      %p216 = por %p214, %p215
      %p217 = scmp.le.s32.totalorder 1, %s15
      %p218 = scmp.lt.s32.totalorder %s15, 3
      %p219 = pnand %p217, %p218
      %p220 = pneg %p219
      // Predicated region
      $region9: #{tpu_custom_call.1} parent=5 // pred_check
        _
      $region10: #{tpu_custom_call.1} parent=5 // pred_check_branch
        %222 = sbr.rel (%p219) target = $region12
      $region11: #{tpu_custom_call.1} parent=5 // pred_region
        %s223 = ssub.s32 %s15, 1
        // Predicated region
        $region13: #{tpu_custom_call.1} parent=11 // pred_check
          %p224 = pneg %p79
        $region14: #{tpu_custom_call.1} parent=11 // pred_check_branch
          %226 = sbr.rel (%p224) target = $region16
        $region15: #{tpu_custom_call.1} parent=11 // pred_region
          %s227 = smul.u32 16, %s25
          %p228 = scmp.lt.s32.totalorder %s227, 15
          %s229 = scalar_select %p228, %s227, 15
          %s230 = smul.addr %s229, 4
          %s231 = scalar_lea.vmem %s1, %s230
          %s232 = smul.u32 16, %s25
        $region16: #{tpu_custom_call.1} parent=11 // pred_fallthru
          _
        // Predicated region
        $region17: #{tpu_custom_call.1} parent=11 // pred_check
          %p233 = pneg %p131
        $region18: #{tpu_custom_call.1} parent=11 // pred_check_branch
          %235 = sbr.rel (%p233) target = $region20
        $region19: #{tpu_custom_call.1} parent=11 // pred_region
          %p236 = scmp.lt.s32.totalorder %s25, 0
          %s237 = scalar_select %p236, %s25, 0
          %s238 = scalar_lea.vmem %s3, %s237
        $region20: #{tpu_custom_call.1} parent=11 // pred_fallthru
          _
        // Predicated region
        $region21: #{tpu_custom_call.1} parent=11 // pred_check
          %p239 = pneg %p183
        $region22: #{tpu_custom_call.1} parent=11 // pred_check_branch
          %241 = sbr.rel (%p239) target = $region24
        $region23: #{tpu_custom_call.1} parent=11 // pred_region
          %p242 = scmp.lt.s32.totalorder %s25, 0
          %s243 = scalar_select %p242, %s25, 0
          %s244 = scalar_lea.vmem %s5, %s243
        $region24: #{tpu_custom_call.1} parent=11 // pred_fallthru
          _
      $region12: #{tpu_custom_call.1} parent=5 // pred_fallthru
        _
      %p245 = scmp.lt.s32.totalorder %s15, 2
      // Predicated region
      $region25: #{tpu_custom_call.1} parent=5 // pred_check
        %p246 = pneg %p245
      $region26: #{tpu_custom_call.1} parent=5 // pred_check_branch
        %248 = sbr.rel (%p246) target = $region28
      $region27: #{tpu_custom_call.1} parent=5 // pred_region
        // Predicated region
        $region29: #{tpu_custom_call.1} parent=27 // pred_check
          %p249 = pneg %p47
        $region30: #{tpu_custom_call.1} parent=27 // pred_check_branch
          %251 = sbr.rel (%p249) target = $region32
        $region31: #{tpu_custom_call.1} parent=27 // pred_region
          %s252 = smul.u32 8, %s22
          %p253 = scmp.lt.s32.totalorder %s252, 15
          %s254 = scalar_select %p253, %s252, 15
          %s255 = smul.addr %s254, 4
          %s256 = scalar_lea.vmem %s0, %s255
          %s257 = smul.u32 8, %s22
        $region32: #{tpu_custom_call.1} parent=27 // pred_fallthru
          _
        // Predicated region
        $region33: #{tpu_custom_call.1} parent=27 // pred_check
          %p258 = pneg %p99
        $region34: #{tpu_custom_call.1} parent=27 // pred_check_branch
          %260 = sbr.rel (%p258) target = $region36
        $region35: #{tpu_custom_call.1} parent=27 // pred_region
          %s261 = smul.u32 8, %s22
          %p262 = scmp.lt.s32.totalorder %s261, 15
          %s263 = scalar_select %p262, %s261, 15
          %s264 = smul.addr %s263, 8
          %s265 = scalar_lea.vmem %s2, %s264
          %s266 = smul.u32 8, %s22
        $region36: #{tpu_custom_call.1} parent=27 // pred_fallthru
          _
        // Predicated region
        $region37: #{tpu_custom_call.1} parent=27 // pred_check
          %p267 = pneg %p151
        $region38: #{tpu_custom_call.1} parent=27 // pred_check_branch
          %269 = sbr.rel (%p267) target = $region40
        $region39: #{tpu_custom_call.1} parent=27 // pred_region
          %s270 = smul.u32 8, %s22
          %p271 = scmp.lt.s32.totalorder %s270, 15
          %s272 = scalar_select %p271, %s270, 15
          %s273 = smul.addr %s272, 8
          %s274 = scalar_lea.vmem %s4, %s273
          %s275 = smul.u32 8, %s22
        $region40: #{tpu_custom_call.1} parent=27 // pred_fallthru
          _
      $region28: #{tpu_custom_call.1} parent=5 // pred_fallthru
        _
      %p276 = scmp.le.s32.totalorder 1, %s15
      %p277 = scmp.lt.s32.totalorder %s15, 3
      %p278 = pnand %p276, %p277
      %p279 = pneg %p278
      // Predicated region
      $region41: #{tpu_custom_call.1} parent=5 // pred_check
        _
      $region42: #{tpu_custom_call.1} parent=5 // pred_check_branch
        %281 = sbr.rel (%p278) target = $region44
      $region43: #{tpu_custom_call.1} parent=5 // pred_region
        %s282 = ssub.s32 %s15, 1
        %s283 = smul.u32 8, %s24
        %p284 = scmp.lt.s32.totalorder %s283, 15
        %s285 = scalar_select %p284, %s283, 15
        %s286 = smul.addr %s285, 4
        %s287 = scalar_lea.vmem %s0, %s286
        %p288 = pneg %p53
        %p289 = pneg %p50
        %s290 = smul.u32 16, %s25
        %p291 = scmp.lt.s32.totalorder %s290, 15
        %s292 = scalar_select %p291, %s290, 15
        %s293 = smul.addr %s292, 4
        %s294 = scalar_lea.vmem %s1, %s293
        %p295 = pneg %p79
        %p296 = pneg %p76
        %s297 = smul.u32 8, %s24
        %p298 = scmp.lt.s32.totalorder %s297, 15
        %s299 = scalar_select %p298, %s297, 15
        %s300 = smul.addr %s299, 8
        %s301 = scalar_lea.vmem %s2, %s300
        %p302 = pneg %p105
        %p303 = pneg %p102
        %p304 = scmp.lt.s32.totalorder %s25, 0
        %s305 = scalar_select %p304, %s25, 0
        %s306 = scalar_lea.vmem %s3, %s305
        %p307 = pneg %p131
        %p308 = pneg %p128
        %s309 = smul.u32 8, %s24
        %p310 = scmp.lt.s32.totalorder %s309, 15
        %s311 = scalar_select %p310, %s309, 15
        %s312 = smul.addr %s311, 8
        %s313 = scalar_lea.vmem %s4, %s312
        %p314 = pneg %p157
        %p315 = pneg %p154
        %p316 = scmp.lt.s32.totalorder %s25, 0
        %s317 = scalar_select %p316, %s25, 0
        %s318 = scalar_lea.vmem %s5, %s317
        %p319 = pneg %p183
        %p320 = pneg %p180
        %p321 = pneg %p209
        %p322 = pneg %p206
        %s323 = sand.u32 %s196, 1
        %s324 = scalar_lea.sflag [#allocation3], %s323
        %s325 = sand.u32 %s196, 1
        %s326 = smul.addr %s325, 64
        %s327 = scalar_lea.vmem [#allocation2], %s326
        %s328 = smul.u32 8, %s24
        %p329 = scmp.lt.s32.totalorder %s328, 15
        %s330 = scalar_select %p329, %s328, 15
        %s331 = smul.addr %s330, 4
        %s332 = scalar_lea.vmem %s0, %s331
        %s333 = smul.u32 8, %s24
        %s334 = smul.u32 16, %s25
        %p335 = scmp.lt.s32.totalorder %s334, 15
        %s336 = scalar_select %p335, %s334, 15
        %s337 = smul.addr %s336, 4
        %s338 = scalar_lea.vmem %s1, %s337
        %s339 = smul.u32 16, %s25
        %s340 = smul.u32 8, %s24
        %p341 = scmp.lt.s32.totalorder %s340, 15
        %s342 = scalar_select %p341, %s340, 15
        %s343 = smul.addr %s342, 8
        %s344 = scalar_lea.vmem %s2, %s343
        %s345 = smul.u32 8, %s24
        %p346 = scmp.lt.s32.totalorder %s25, 0
        %s347 = scalar_select %p346, %s25, 0
        %s348 = scalar_lea.vmem %s3, %s347
        %s349 = smul.u32 8, %s24
        %p350 = scmp.lt.s32.totalorder %s349, 15
        %s351 = scalar_select %p350, %s349, 15
        %s352 = smul.addr %s351, 8
        %s353 = scalar_lea.vmem %s4, %s352
        %s354 = smul.u32 8, %s24
        %p355 = scmp.lt.s32.totalorder %s25, 0
        %s356 = scalar_select %p355, %s25, 0
        %s357 = scalar_lea.vmem %s5, %s356
        %s358 = smul.u32 8, %s24
        %p360 = scmp.eq.s32.totalorder %s25, 0
        // Predicated region
        $region45: #{tpu_custom_call.1} parent=43 // pred_check
          %p361 = pneg %p360
        $region46: #{tpu_custom_call.1} parent=43 // pred_check_branch
          %363 = sbr.rel (%p361) target = $region48
        $region47: #{tpu_custom_call.1} parent=43 // pred_region
          %364 = vst [vmem:[%s327] sm:$0xff] 0.0
          %365 = vst [vmem:[%s327 + $0x8] sm:$0xff] 0.0
          %366 = vst [vmem:[%s327 + $0x10] sm:$0xff] 0.0
          %367 = vst [vmem:[%s327 + $0x18] sm:$0xff] 0.0
          %368 = vst [vmem:[%s327 + $0x20] sm:$0xff] 0.0
          %369 = vst [vmem:[%s327 + $0x28] sm:$0xff] 0.0
          %370 = vst [vmem:[%s327 + $0x30] sm:$0xff] 0.0
          %371 = vst [vmem:[%s327 + $0x38] sm:$0xff] 0.0
        $region48: #{tpu_custom_call.1} parent=43 // pred_fallthru
          _
        %v372 = vld [vmem:[%s332] sm:$0xf]
        %v373 = vld [vmem:[%s332 + $0x4] sm:$0xf]
        %v374 = vld [vmem:[%s332 + $0x8] sm:$0xf]
        %v375 = vld [vmem:[%s332 + $0xc] sm:$0xf]
        %v376 = vld [vmem:[%s332 + $0x10] sm:$0xf]
        %v377 = vld [vmem:[%s332 + $0x14] sm:$0xf]
        %v378 = vld [vmem:[%s332 + $0x18] sm:$0xf]
        %v379 = vld [vmem:[%s332 + $0x1c] sm:$0xf]
        %v380 = vld [vmem:[%s338] sm:$0xf]
        %v381 = vld [vmem:[%s338 + $0x4] sm:$0xf]
        %v382 = vld [vmem:[%s338 + $0x8] sm:$0xf]
        %v383 = vld [vmem:[%s338 + $0xc] sm:$0xf]
        %v384 = vld [vmem:[%s338 + $0x10] sm:$0xf]
        %v385 = vld [vmem:[%s338 + $0x14] sm:$0xf]
        %v386 = vld [vmem:[%s338 + $0x18] sm:$0xf]
        %v387 = vld [vmem:[%s338 + $0x1c] sm:$0xf]
        %v388 = vld [vmem:[%s338 + $0x20] sm:$0xf]
        %v389 = vld [vmem:[%s338 + $0x24] sm:$0xf]
        %v390 = vld [vmem:[%s338 + $0x28] sm:$0xf]
        %v391 = vld [vmem:[%s338 + $0x2c] sm:$0xf]
        %v392 = vld [vmem:[%s338 + $0x30] sm:$0xf]
        %v393 = vld [vmem:[%s338 + $0x34] sm:$0xf]
        %v394 = vld [vmem:[%s338 + $0x38] sm:$0xf]
        %v395 = vld [vmem:[%s338 + $0x3c] sm:$0xf]
        %v404 = vunpack.c.l.b16 %v372
        %v405 = vunpack.c.l.b16 %v373
        %v406 = vunpack.c.l.b16 %v374
        %v407 = vunpack.c.l.b16 %v375
        %v408 = vunpack.c.l.b16 %v376
        %v409 = vunpack.c.l.b16 %v377
        %v410 = vunpack.c.l.b16 %v378
        %v411 = vunpack.c.l.b16 %v379
        %v412 = vpack.c.b16 %v405, %v404
        %v413 = vpack.c.b16 %v407, %v406
        %v414 = vpack.c.b16 %v409, %v408
        %v415 = vpack.c.b16 %v411, %v410
        %v432 = vunpack.c.l.b16 %v380
        %v433 = vunpack.c.l.b16 %v381
        %v434 = vunpack.c.l.b16 %v382
        %v435 = vunpack.c.l.b16 %v383
        %v436 = vunpack.c.l.b16 %v384
        %v437 = vunpack.c.l.b16 %v385
        %v438 = vunpack.c.l.b16 %v386
        %v439 = vunpack.c.l.b16 %v387
        %v440 = vunpack.c.l.b16 %v388
        %v441 = vunpack.c.l.b16 %v389
        %v442 = vunpack.c.l.b16 %v390
        %v443 = vunpack.c.l.b16 %v391
        %v444 = vunpack.c.l.b16 %v392
        %v445 = vunpack.c.l.b16 %v393
        %v446 = vunpack.c.l.b16 %v394
        %v447 = vunpack.c.l.b16 %v395
        %v448 = vpack.c.b16 %v433, %v432
        %v449 = vpack.c.b16 %v435, %v434
        %v450 = vpack.c.b16 %v437, %v436
        %v451 = vpack.c.b16 %v439, %v438
        %v452 = vpack.c.b16 %v441, %v440
        %v453 = vpack.c.b16 %v443, %v442
        %v454 = vpack.c.b16 %v445, %v444
        %v455 = vpack.c.b16 %v447, %v446
        %vm456 = vcmask 261120
        %v458 = vsel %vm456, %v412, 0
        %v461 = vsel %vm456, %v413, 0
        %v464 = vsel %vm456, %v414, 0
        %v467 = vsel %vm456, %v415, 0
        %v470 = vsel %vm456, %v448, 0
        %v473 = vsel %vm456, %v449, 0
        %v476 = vsel %vm456, %v450, 0
        %v479 = vsel %vm456, %v451, 0
        %v482 = vsel %vm456, %v452, 0
        %v485 = vsel %vm456, %v453, 0
        %v488 = vsel %vm456, %v454, 0
        %v491 = vsel %vm456, %v455, 0
        %493 = vmatprep.subr.bf16.mxu0 0
        %494 = vmatpush1.bf16.xpose.msra.mxu0 %v470
        %495 = vmatprep.subr.bf16.mxu0 0
        %496 = vmatpush1.bf16.xpose.msra.mxu0 %v473
        %497 = vmatprep.subr.bf16.mxu0 0
        %498 = vmatpush1.bf16.xpose.msra.mxu0 %v476
        %499 = vmatprep.subr.bf16.mxu0 0
        %500 = vmatpush1.bf16.xpose.msra.mxu0 %v479
        %501 = vmatprep.subr.bf16.mxu0 0
        %502 = vmatpush1.bf16.xpose.msra.mxu0 %v482
        %503 = vmatprep.subr.bf16.mxu0 0
        %504 = vmatpush1.bf16.xpose.msra.mxu0 %v485
        %505 = vmatprep.subr.bf16.mxu0 0
        %506 = vmatpush1.bf16.xpose.msra.mxu0 %v488
        %507 = vmatprep.subr.bf16.mxu0 0
        %508 = vmatpush1.bf16.xpose.msra.mxu0 %v491
        %509 = vmatprep.subr.bf16.mxu0 0
        %510 = vmatpush1.bf16.xpose.msra.mxu0 0
        %511 = vmatprep.subr.bf16.mxu0 0
        %512 = vmatpush1.bf16.xpose.msra.mxu0 0
        %513 = vmatprep.subr.bf16.mxu0 0
        %514 = vmatpush1.bf16.xpose.msra.mxu0 0
        %515 = vmatprep.subr.bf16.mxu0 0
        %516 = vmatpush1.bf16.xpose.msra.mxu0 0
        %517 = vmatprep.subr.bf16.mxu0 0
        %518 = vmatpush1.bf16.xpose.msra.mxu0 0
        %519 = vmatprep.subr.bf16.mxu0 0
        %520 = vmatpush1.bf16.xpose.msra.mxu0 0
        %521 = vmatprep.subr.bf16.mxu0 0
        %522 = vmatpush1.bf16.xpose.msra.mxu0 0
        %523 = vmatprep.subr.bf16.mxu0 0
        %524 = vmatpush1.bf16.xpose.msra.mxu0 0
        %525 = vmatprep.mubr.bf16.mxu0 0
        %526 = vmatmul.mubr.bf16.gmra.mrb[0].mxu0 %v458
        %v527 = vpop.f32.mrb[0].mxu0
        %v528 = vadd.f32 0.0, %v527
        %v529 = vpop.f32.mrb[0].mxu0
        %v530 = vpop.f32.mrb[0].mxu0
        %v531 = vadd.f32 0.0, %v530
        %v532 = vpop.f32.mrb[0].mxu0
        %533 = vmatprep.mubr.bf16.mxu0 0
        %534 = vmatmul.mubr.bf16.gmra.mrb[0].mxu0 %v461
        %v535 = vpop.f32.mrb[0].mxu0
        %v536 = vadd.f32 0.0, %v535
        %v537 = vpop.f32.mrb[0].mxu0
        %v538 = vpop.f32.mrb[0].mxu0
        %v539 = vadd.f32 0.0, %v538
        %v540 = vpop.f32.mrb[0].mxu0
        %541 = vmatprep.mubr.bf16.mxu0 0
        %542 = vmatmul.mubr.bf16.gmra.mrb[0].mxu0 %v464
        %v543 = vpop.f32.mrb[0].mxu0
        %v544 = vadd.f32 0.0, %v543
        %v545 = vpop.f32.mrb[0].mxu0
        %v546 = vpop.f32.mrb[0].mxu0
        %v547 = vadd.f32 0.0, %v546
        %v548 = vpop.f32.mrb[0].mxu0
        %549 = vmatprep.mubr.bf16.mxu0 0
        %550 = vmatmul.mubr.bf16.gmra.mrb[0].mxu0 %v467
        %v551 = vpop.f32.mrb[0].mxu0
        %v552 = vadd.f32 0.0, %v551
        %v553 = vpop.f32.mrb[0].mxu0
        %v554 = vpop.f32.mrb[0].mxu0
        %v555 = vadd.f32 0.0, %v554
        %v556 = vpop.f32.mrb[0].mxu0
        %557 = vdwg.mxu0
        %v558 = vld [vmem:[%s344] sm:$0xff]
        %v559 = vld [vmem:[%s344 + $0x8] sm:$0xff]
        %v560 = vld [vmem:[%s344 + $0x10] sm:$0xff]
        %v561 = vld [vmem:[%s344 + $0x18] sm:$0xff]
        %v562 = vld [vmem:[%s344 + $0x20] sm:$0xff]
        %v563 = vld [vmem:[%s344 + $0x28] sm:$0xff]
        %v564 = vld [vmem:[%s344 + $0x30] sm:$0xff]
        %v565 = vld [vmem:[%s344 + $0x38] sm:$0xff]
        %v566 = vld [vmem:[%s348] sm:$0x1]
        %568 = vset.pattern.permute.xlu0 0
        %569 = vperm.xlu0 %568, %v558
        %v570 = vpop.permute.xlu0 %569
        %573 = vset.pattern.permute.xlu0 0
        %574 = vperm.xlu0 %573, %v559
        %v575 = vpop.permute.xlu0 %574
        %578 = vset.pattern.permute.xlu0 0
        %579 = vperm.xlu0 %578, %v560
        %v580 = vpop.permute.xlu0 %579
        %583 = vset.pattern.permute.xlu0 0
        %584 = vperm.xlu0 %583, %v561
        %v585 = vpop.permute.xlu0 %584
        %588 = vset.pattern.permute.xlu0 0
        %589 = vperm.xlu0 %588, %v562
        %v590 = vpop.permute.xlu0 %589
        %593 = vset.pattern.permute.xlu0 0
        %594 = vperm.xlu0 %593, %v563
        %v595 = vpop.permute.xlu0 %594
        %598 = vset.pattern.permute.xlu0 0
        %599 = vperm.xlu0 %598, %v564
        %v600 = vpop.permute.xlu0 %599
        %603 = vset.pattern.permute.xlu0 0
        %604 = vperm.xlu0 %603, %v565
        %v605 = vpop.permute.xlu0 %604
        %v608 = vlaneseq
        %v609 = vshrl.u32 %v608, 7
        %v610 = vsub.s32 0, %v609
        %v611 = vrot.slane %v566, %v610
        %v613 = vadd.f32 %v570, %v611
        %v614 = vadd.f32 %v575, %v611
        %v615 = vadd.f32 %v580, %v611
        %v616 = vadd.f32 %v585, %v611
        %v617 = vadd.f32 %v590, %v611
        %v618 = vadd.f32 %v595, %v611
        %v619 = vadd.f32 %v600, %v611
        %v620 = vadd.f32 %v605, %v611
        %v621 = vmul.f32 %v528, 2.0
        %v622 = vmul.f32 %v531, 2.0
        %v623 = vmul.f32 %v536, 2.0
        %v624 = vmul.f32 %v539, 2.0
        %v625 = vmul.f32 %v544, 2.0
        %v626 = vmul.f32 %v547, 2.0
        %v627 = vmul.f32 %v552, 2.0
        %v628 = vmul.f32 %v555, 2.0
        %v629 = vsub.f32 %v613, %v621
        %v630 = vsub.f32 %v614, %v622
        %v631 = vsub.f32 %v615, %v623
        %v632 = vsub.f32 %v616, %v624
        %v633 = vsub.f32 %v617, %v625
        %v634 = vsub.f32 %v618, %v626
        %v635 = vsub.f32 %v619, %v627
        %v636 = vsub.f32 %v620, %v628
        %v637 = vmax.f32 %v629, 0.0
        %v638 = vmax.f32 %v630, 0.0
        %v639 = vmax.f32 %v631, 0.0
        %v640 = vmax.f32 %v632, 0.0
        %v641 = vmax.f32 %v633, 0.0
        %v642 = vmax.f32 %v634, 0.0
        %v643 = vmax.f32 %v635, 0.0
        %v644 = vmax.f32 %v636, 0.0
        %v645 = vmul.f32 %v637, 4.0
        %v646 = vmul.f32 %v638, 4.0
        %v647 = vmul.f32 %v639, 4.0
        %v648 = vmul.f32 %v640, 4.0
        %v649 = vmul.f32 %v641, 4.0
        %v650 = vmul.f32 %v642, 4.0
        %v651 = vmul.f32 %v643, 4.0
        %v652 = vmul.f32 %v644, 4.0
        %v653 = vrsqrt.pop %v637
        %v654 = vmul.f32 %v637, %v653
        %vm655 = vcmp.eq.f32.partialorder %v637, inf
        %v656 = vsel %vm655, %v637, %v654
        %vm657 = vcmp.eq.f32.partialorder %v637, 0.0
        %v658 = vand.u32 %v637, 2147483648
        %v659 = vsel %vm657, %v658, %v656
        %v660 = vrsqrt.pop %v638
        %v661 = vmul.f32 %v638, %v660
        %vm662 = vcmp.eq.f32.partialorder %v638, inf
        %v663 = vsel %vm662, %v638, %v661
        %vm664 = vcmp.eq.f32.partialorder %v638, 0.0
        %v665 = vand.u32 %v638, 2147483648
        %v666 = vsel %vm664, %v665, %v663
        %v667 = vrsqrt.pop %v639
        %v668 = vmul.f32 %v639, %v667
        %vm669 = vcmp.eq.f32.partialorder %v639, inf
        %v670 = vsel %vm669, %v639, %v668
        %vm671 = vcmp.eq.f32.partialorder %v639, 0.0
        %v672 = vand.u32 %v639, 2147483648
        %v673 = vsel %vm671, %v672, %v670
        %v674 = vrsqrt.pop %v640
        %v675 = vmul.f32 %v640, %v674
        %vm676 = vcmp.eq.f32.partialorder %v640, inf
        %v677 = vsel %vm676, %v640, %v675
        %vm678 = vcmp.eq.f32.partialorder %v640, 0.0
        %v679 = vand.u32 %v640, 2147483648
        %v680 = vsel %vm678, %v679, %v677
        %v681 = vrsqrt.pop %v641
        %v682 = vmul.f32 %v641, %v681
        %vm683 = vcmp.eq.f32.partialorder %v641, inf
        %v684 = vsel %vm683, %v641, %v682
        %vm685 = vcmp.eq.f32.partialorder %v641, 0.0
        %v686 = vand.u32 %v641, 2147483648
        %v687 = vsel %vm685, %v686, %v684
        %v688 = vrsqrt.pop %v642
        %v689 = vmul.f32 %v642, %v688
        %vm690 = vcmp.eq.f32.partialorder %v642, inf
        %v691 = vsel %vm690, %v642, %v689
        %vm692 = vcmp.eq.f32.partialorder %v642, 0.0
        %v693 = vand.u32 %v642, 2147483648
        %v694 = vsel %vm692, %v693, %v691
        %v695 = vrsqrt.pop %v643
        %v696 = vmul.f32 %v643, %v695
        %vm697 = vcmp.eq.f32.partialorder %v643, inf
        %v698 = vsel %vm697, %v643, %v696
        %vm699 = vcmp.eq.f32.partialorder %v643, 0.0
        %v700 = vand.u32 %v643, 2147483648
        %v701 = vsel %vm699, %v700, %v698
        %v702 = vrsqrt.pop %v644
        %v703 = vmul.f32 %v644, %v702
        %vm704 = vcmp.eq.f32.partialorder %v644, inf
        %v705 = vsel %vm704, %v644, %v703
        %vm706 = vcmp.eq.f32.partialorder %v644, 0.0
        %v707 = vand.u32 %v644, 2147483648
        %v708 = vsel %vm706, %v707, %v705
        %v709 = vmul.f32 %v659, 2.0
        %v710 = vmul.f32 %v666, 2.0
        %v711 = vmul.f32 %v673, 2.0
        %v712 = vmul.f32 %v680, 2.0
        %v713 = vmul.f32 %v687, 2.0
        %v714 = vmul.f32 %v694, 2.0
        %v715 = vmul.f32 %v701, 2.0
        %v716 = vmul.f32 %v708, 2.0
        %v717 = vsub.f32 2.5, %v709
        %v718 = vsub.f32 2.5, %v710
        %v719 = vsub.f32 2.5, %v711
        %v720 = vsub.f32 2.5, %v712
        %v721 = vsub.f32 2.5, %v713
        %v722 = vsub.f32 2.5, %v714
        %v723 = vsub.f32 2.5, %v715
        %v724 = vsub.f32 2.5, %v716
        %v725 = vmax.f32 %v717, 0.0
        %v726 = vmax.f32 %v718, 0.0
        %v727 = vmax.f32 %v719, 0.0
        %v728 = vmax.f32 %v720, 0.0
        %v729 = vmax.f32 %v721, 0.0
        %v730 = vmax.f32 %v722, 0.0
        %v731 = vmax.f32 %v723, 0.0
        %v732 = vmax.f32 %v724, 0.0
        %v733 = vmul.f32 %v725, %v725
        %v734 = vmul.f32 %v726, %v726
        %v735 = vmul.f32 %v727, %v727
        %v736 = vmul.f32 %v728, %v728
        %v737 = vmul.f32 %v729, %v729
        %v738 = vmul.f32 %v730, %v730
        %v739 = vmul.f32 %v731, %v731
        %v740 = vmul.f32 %v732, %v732
        %v741 = vld [vmem:[%s353] sm:$0xff]
        %v742 = vld [vmem:[%s353 + $0x8] sm:$0xff]
        %v743 = vld [vmem:[%s353 + $0x10] sm:$0xff]
        %v744 = vld [vmem:[%s353 + $0x18] sm:$0xff]
        %v745 = vld [vmem:[%s353 + $0x20] sm:$0xff]
        %v746 = vld [vmem:[%s353 + $0x28] sm:$0xff]
        %v747 = vld [vmem:[%s353 + $0x30] sm:$0xff]
        %v748 = vld [vmem:[%s353 + $0x38] sm:$0xff]
        %v749 = vld [vmem:[%s357] sm:$0x1]
        %750 = vset.pattern.permute.xlu0 0
        %751 = vperm.xlu0 %750, %v741
        %v752 = vpop.permute.xlu0 %751
        %753 = vset.pattern.permute.xlu0 0
        %754 = vperm.xlu0 %753, %v742
        %v755 = vpop.permute.xlu0 %754
        %756 = vset.pattern.permute.xlu0 0
        %757 = vperm.xlu0 %756, %v743
        %v758 = vpop.permute.xlu0 %757
        %759 = vset.pattern.permute.xlu0 0
        %760 = vperm.xlu0 %759, %v744
        %v761 = vpop.permute.xlu0 %760
        %762 = vset.pattern.permute.xlu0 0
        %763 = vperm.xlu0 %762, %v745
        %v764 = vpop.permute.xlu0 %763
        %765 = vset.pattern.permute.xlu0 0
        %766 = vperm.xlu0 %765, %v746
        %v767 = vpop.permute.xlu0 %766
        %768 = vset.pattern.permute.xlu0 0
        %769 = vperm.xlu0 %768, %v747
        %v770 = vpop.permute.xlu0 %769
        %771 = vset.pattern.permute.xlu0 0
        %772 = vperm.xlu0 %771, %v748
        %v773 = vpop.permute.xlu0 %772
        %v774 = vlaneseq
        %v775 = vshrl.u32 %v774, 7
        %v776 = vsub.s32 0, %v775
        %v777 = vrot.slane %v749, %v776
        %vm778 = vcmp.eq.s32.totalorder %v752, %v777
        %vm779 = vcmp.eq.s32.totalorder %v755, %v777
        %vm780 = vcmp.eq.s32.totalorder %v758, %v777
        %vm781 = vcmp.eq.s32.totalorder %v761, %v777
        %vm782 = vcmp.eq.s32.totalorder %v764, %v777
        %vm783 = vcmp.eq.s32.totalorder %v767, %v777
        %vm784 = vcmp.eq.s32.totalorder %v770, %v777
        %vm785 = vcmp.eq.s32.totalorder %v773, %v777
        %v786 = vsel %vm778, %v645, %v733
        %v787 = vsel %vm779, %v646, %v734
        %v788 = vsel %vm780, %v647, %v735
        %v789 = vsel %vm781, %v648, %v736
        %v790 = vsel %vm782, %v649, %v737
        %v791 = vsel %vm783, %v650, %v738
        %v792 = vsel %vm784, %v651, %v739
        %v793 = vsel %vm785, %v652, %v740
        %s794 = smul.u32 %s24, 64
        %s795 = smul.u32 %s25, 128
        %s796 = sadd.s32 %s795, 128
        %p797 = scmp.lt.s32.totalorder %s794, %s796
        %s798 = sadd.s32 %s794, 64
        %p799 = scmp.lt.s32.totalorder %s795, %s798
        %p800 = pnand %p797, %p799
        %p801 = pneg %p800
        %p802 = scmp.gt.s32.totalorder %s798, 8
        %p803 = scmp.gt.s32.totalorder %s796, 8
        %p804 = por %p802, %p803
        %p805 = por %p801, %p804
        // Predicated region
        $region49: #{tpu_custom_call.1} parent=43 // pred_check
          %p806 = pneg %p805
        $region50: #{tpu_custom_call.1} parent=43 // pred_check_branch
          %808 = sbr.rel (%p806) target = $region52
        $region51: #{tpu_custom_call.1} parent=43 // pred_region
          %v809 = vlaneseq
          %v810 = vshrl.u32 %v809, 7
          %v811 = vadd.s32 %v810, 8
          %v812 = vadd.s32 %v810, 16
          %v813 = vadd.s32 %v810, 24
          %v814 = vadd.s32 %v810, 32
          %v815 = vadd.s32 %v810, 40
          %v816 = vadd.s32 %v810, 48
          %v817 = vadd.s32 %v810, 56
          %v818 = vstv %s794
          %v819 = vadd.s32 %v818, %v810
          %v820 = vadd.s32 %v818, %v811
          %v821 = vadd.s32 %v818, %v812
          %v822 = vadd.s32 %v818, %v813
          %v823 = vadd.s32 %v818, %v814
          %v824 = vadd.s32 %v818, %v815
          %v825 = vadd.s32 %v818, %v816
          %v826 = vadd.s32 %v818, %v817
          %v827 = vlaneseq
          %v828 = vand.u32 %v827, 127
          %v829 = vstv %s795
          %v830 = vadd.s32 %v829, %v828
          %vm831 = vcmp.ne.s32.totalorder %v819, %v830
          %vm832 = vcmp.ne.s32.totalorder %v820, %v830
          %vm833 = vcmp.ne.s32.totalorder %v821, %v830
          %vm834 = vcmp.ne.s32.totalorder %v822, %v830
          %vm835 = vcmp.ne.s32.totalorder %v823, %v830
          %vm836 = vcmp.ne.s32.totalorder %v824, %v830
          %vm837 = vcmp.ne.s32.totalorder %v825, %v830
          %vm838 = vcmp.ne.s32.totalorder %v826, %v830
          %vm839 = vcmp.lt.s32.totalorder %v819, 8
          %vm840 = vcmp.lt.s32.totalorder %v820, 8
          %vm841 = vcmp.lt.s32.totalorder %v821, 8
          %vm842 = vcmp.lt.s32.totalorder %v822, 8
          %vm843 = vcmp.lt.s32.totalorder %v823, 8
          %vm844 = vcmp.lt.s32.totalorder %v824, 8
          %vm845 = vcmp.lt.s32.totalorder %v825, 8
          %vm846 = vcmp.lt.s32.totalorder %v826, 8
          %vm847 = vcmp.lt.s32.totalorder %v830, 8
          %vm848 = vmand %vm839, %vm847
          %vm849 = vmand %vm840, %vm847
          %vm850 = vmand %vm841, %vm847
          %vm851 = vmand %vm842, %vm847
          %vm852 = vmand %vm843, %vm847
          %vm853 = vmand %vm844, %vm847
          %vm854 = vmand %vm845, %vm847
          %vm855 = vmand %vm846, %vm847
          %vm856 = vmand %vm831, %vm848
          %vm857 = vmand %vm832, %vm849
          %vm858 = vmand %vm833, %vm850
          %vm859 = vmand %vm834, %vm851
          %vm860 = vmand %vm835, %vm852
          %vm861 = vmand %vm836, %vm853
          %vm862 = vmand %vm837, %vm854
          %vm863 = vmand %vm838, %vm855
          %v864 = vld [vmem:[%s327] sm:$0xff]
          %v865 = vld [vmem:[%s327 + $0x8] sm:$0xff]
          %v866 = vld [vmem:[%s327 + $0x10] sm:$0xff]
          %v867 = vld [vmem:[%s327 + $0x18] sm:$0xff]
          %v868 = vld [vmem:[%s327 + $0x20] sm:$0xff]
          %v869 = vld [vmem:[%s327 + $0x28] sm:$0xff]
          %v870 = vld [vmem:[%s327 + $0x30] sm:$0xff]
          %v871 = vld [vmem:[%s327 + $0x38] sm:$0xff]
          %v872 = vsel %vm856, %v786, 0.0
          %v873 = vsel %vm857, %v787, 0.0
          %v874 = vsel %vm858, %v788, 0.0
          %v875 = vsel %vm859, %v789, 0.0
          %v876 = vsel %vm860, %v790, 0.0
          %v877 = vsel %vm861, %v791, 0.0
          %v878 = vsel %vm862, %v792, 0.0
          %v879 = vsel %vm863, %v793, 0.0
          %v880 = vadd.f32 %v864, %v872
          %v881 = vadd.f32 %v865, %v873
          %v882 = vadd.f32 %v866, %v874
          %v883 = vadd.f32 %v867, %v875
          %v884 = vadd.f32 %v868, %v876
          %v885 = vadd.f32 %v869, %v877
          %v886 = vadd.f32 %v870, %v878
          %v887 = vadd.f32 %v871, %v879
          %888 = vst [vmem:[%s327] sm:$0xff] %v880
          %889 = vst [vmem:[%s327 + $0x8] sm:$0xff] %v881
          %890 = vst [vmem:[%s327 + $0x10] sm:$0xff] %v882
          %891 = vst [vmem:[%s327 + $0x18] sm:$0xff] %v883
          %892 = vst [vmem:[%s327 + $0x20] sm:$0xff] %v884
          %893 = vst [vmem:[%s327 + $0x28] sm:$0xff] %v885
          %894 = vst [vmem:[%s327 + $0x30] sm:$0xff] %v886
          %895 = vst [vmem:[%s327 + $0x38] sm:$0xff] %v887
        $region52: #{tpu_custom_call.1} parent=43 // pred_fallthru
          _
        %p896 = pneg %p805
        // Predicated region
        $region53: #{tpu_custom_call.1} parent=43 // pred_check
          _
        $region54: #{tpu_custom_call.1} parent=43 // pred_check_branch
          %898 = sbr.rel (%p805) target = $region56
        $region55: #{tpu_custom_call.1} parent=43 // pred_region
          %v899 = vld [vmem:[%s327] sm:$0xff]
          %v900 = vld [vmem:[%s327 + $0x8] sm:$0xff]
          %v901 = vld [vmem:[%s327 + $0x10] sm:$0xff]
          %v902 = vld [vmem:[%s327 + $0x18] sm:$0xff]
          %v903 = vld [vmem:[%s327 + $0x20] sm:$0xff]
          %v904 = vld [vmem:[%s327 + $0x28] sm:$0xff]
          %v905 = vld [vmem:[%s327 + $0x30] sm:$0xff]
          %v906 = vld [vmem:[%s327 + $0x38] sm:$0xff]
          %v907 = vadd.f32 %v899, %v786
          %v908 = vadd.f32 %v900, %v787
          %v909 = vadd.f32 %v901, %v788
          %v910 = vadd.f32 %v902, %v789
          %v911 = vadd.f32 %v903, %v790
          %v912 = vadd.f32 %v904, %v791
          %v913 = vadd.f32 %v905, %v792
          %v914 = vadd.f32 %v906, %v793
          %915 = vst [vmem:[%s327] sm:$0xff] %v907
          %916 = vst [vmem:[%s327 + $0x8] sm:$0xff] %v908
          %917 = vst [vmem:[%s327 + $0x10] sm:$0xff] %v909
          %918 = vst [vmem:[%s327 + $0x18] sm:$0xff] %v910
          %919 = vst [vmem:[%s327 + $0x20] sm:$0xff] %v911
          %920 = vst [vmem:[%s327 + $0x28] sm:$0xff] %v912
          %921 = vst [vmem:[%s327 + $0x30] sm:$0xff] %v913
          %922 = vst [vmem:[%s327 + $0x38] sm:$0xff] %v914
        $region56: #{tpu_custom_call.1} parent=43 // pred_fallthru
          _
        %s923 = sand.u32 %s196, 1
        %s924 = scalar_lea.sflag [#allocation3], %s923
        %s925 = sand.u32 %s196, 1
        %s926 = smul.addr %s925, 64
        %s927 = scalar_lea.vmem [#allocation2], %s926
        // Predicated region
        $region57: #{tpu_custom_call.1} parent=43 // pred_check
          %p928 = pneg %p206
        $region58: #{tpu_custom_call.1} parent=43 // pred_check_branch
          %930 = sbr.rel (%p928) target = $region60
        $region59: #{tpu_custom_call.1} parent=43 // pred_region
          %s931 = smul.u32 8, %s24
          %s933 = ssub.s32 1024, 1024
          %934 = vsyncadd %s924, %s933
          %s935 = smul.addr %s931, 128
          %s936 = scalar_lea.hbm %s6, %s935
          %s937 = sshll.u32 %s927, 4
          %s938 = int_to_ptr.vmem [resolvable:$true] %s937
          %943 = dma.vmem_to_hbm [thread:$0]  %s938, 1024, %s936, %s924, 128, 128, 8
        $region60: #{tpu_custom_call.1} parent=43 // pred_fallthru
          _
      $region44: #{tpu_custom_call.1} parent=5 // pred_fallthru
        _
      %p944 = scmp.le.s32.totalorder 2, %s15
      // Predicated region
      $region61: #{tpu_custom_call.1} parent=5 // pred_check
        %p945 = pneg %p944
      $region62: #{tpu_custom_call.1} parent=5 // pred_check_branch
        %947 = sbr.rel (%p945) target = $region64
      $region63: #{tpu_custom_call.1} parent=5 // pred_region
        %s948 = ssub.s32 %s15, 2
        // Predicated region
        $region65: #{tpu_custom_call.1} parent=63 // pred_check
          %p949 = pneg %p212
        $region66: #{tpu_custom_call.1} parent=63 // pred_check_branch
          %951 = sbr.rel (%p949) target = $region68
        $region67: #{tpu_custom_call.1} parent=63 // pred_region
          %s952 = sand.u32 %s197, 1
          %s953 = scalar_lea.sflag [#allocation3], %s952
          %s954 = sand.u32 %s197, 1
          %s955 = smul.addr %s954, 64
          %s956 = scalar_lea.vmem [#allocation2], %s955
          %957 = dma.done %s953, 1024
        $region68: #{tpu_custom_call.1} parent=63 // pred_fallthru
          _
      $region64: #{tpu_custom_call.1} parent=5 // pred_fallthru
        _
    $region6: #{tpu_custom_call.1} parent=1 // loop_footer
      %s19 = sadd.s32 1, %s15
    $region7: #{tpu_custom_call.1} parent=1 // loop_footer_branch
      %14 = sbr.rel target = $region3
    $region8: #{tpu_custom_call.1} parent=1 // loop_exit
      _
    %958 = vsyncpa [#allocation3], 1
    %s959 = scalar_lea.sflag [#allocation3], 1
    %960 = vsyncpa %s959, 1

</llo_original>
